<compile_context>
chip_gen: v7x
topology: tpu7x:2x2x1
jax: 0.10.0
libtpu: 0.0.40
codegen_flags: <defaults>
</compile_context>

<pallas_src>
import jax
import jax.numpy as jnp
from jax.experimental import pallas as pl
from jax.experimental.pallas import tpu as pltpu

_LANE = 128
_SUBLANE = 8


def _round_up(x: int, m: int) -> int:
    return ((x + m - 1) // m) * m


def _forward_env_model_kernel(
    obs_ref, act_ref,
    enc_w1_ref, enc_b1_ref, enc_w2_ref, enc_b2_ref,
    fwd_w1e_ref, fwd_w1a_ref, fwd_b1_ref, fwd_w2_ref, fwd_b2_ref,
    out_ref,
):
    obs = obs_ref[...]          # bf16 (TB, OBS_P)
    act = act_ref[...]          # bf16 (TB, ACT_P)

    # ---- encoder MLP: Linear -> ReLU -> Linear (bf16 operands, f32 accumulation) ----
    h = jnp.dot(obs, enc_w1_ref[...], preferred_element_type=jnp.float32) + enc_b1_ref[...]
    h = jnp.maximum(h, 0.0).astype(jnp.bfloat16)
    enc = jnp.dot(h, enc_w2_ref[...], preferred_element_type=jnp.float32) + enc_b2_ref[...]
    enc = enc.astype(jnp.bfloat16)

    # ---- forward model MLP on hstack((enc, act)) ----
    # hstack((enc, act)) @ W1 == enc @ W1_enc + act @ W1_act   (weights pre-split on host)
    g = (jnp.dot(enc, fwd_w1e_ref[...], preferred_element_type=jnp.float32)
         + jnp.dot(act, fwd_w1a_ref[...], preferred_element_type=jnp.float32)
         + fwd_b1_ref[...])
    g = jnp.maximum(g, 0.0).astype(jnp.bfloat16)
    out = jnp.dot(g, fwd_w2_ref[...], preferred_element_type=jnp.float32) + fwd_b2_ref[...]

    out_ref[...] = out          # out_ref is f32 -> cast-free store


def forward_environment_model(obs, action, params, *, encoded_dim, block_batch=512):
    """params: dict with enc_w1, enc_b1, enc_w2, enc_b2, fwd_w1, fwd_b1, fwd_w2, fwd_b2.

    Linear weights are stored transposed from nn.Linear as (in_features, out_features),
    biases as (1, out_features).
    """
    batch, obs_dim = obs.shape
    action_dim = action.shape[1]
    enc_hidden = params["enc_w1"].shape[1]
    fwd_hidden = params["fwd_w1"].shape[1]
    assert params["enc_w2"].shape[1] == encoded_dim
    assert params["fwd_w1"].shape[0] == encoded_dim + action_dim

    # Lane-padded feature dims (zero padding is exact for this network).
    obs_p = _round_up(obs_dim, _LANE)
    act_p = _round_up(action_dim, _LANE)
    h1_p = _round_up(enc_hidden, _LANE)
    enc_p = _round_up(encoded_dim, _LANE)
    h2_p = _round_up(fwd_hidden, _LANE)
    out_p = enc_p

    # Batch tiling: tile of up to `block_batch` rows, padded batch is a multiple of it.
    tb = min(block_batch, _round_up(batch, _SUBLANE))
    b_pad = _round_up(batch, tb)
    grid = (b_pad // tb,)

    bf16, f32 = jnp.bfloat16, jnp.float32

    def pad2(x, rows, cols, dtype):
        x = jnp.asarray(x, jnp.float32)
        x = jnp.pad(x, ((0, rows - x.shape[0]), (0, cols - x.shape[1])))
        return x.astype(dtype)

    # Activations: zero-pad batch + feature dims, cast to bf16 for the MXU.
    obs_v = pad2(obs, b_pad, obs_p, bf16)
    act_v = pad2(action, b_pad, act_p, bf16)

    # Weights (bf16) / biases (f32), zero-padded to lane width.
    enc_w1_p = pad2(params["enc_w1"], obs_p, h1_p, bf16)
    enc_b1_p = pad2(params["enc_b1"], 1, h1_p, f32)
    enc_w2_p = pad2(params["enc_w2"], h1_p, enc_p, bf16)
    enc_b2_p = pad2(params["enc_b2"], 1, enc_p, f32)

    fwd_w1 = jnp.asarray(params["fwd_w1"], jnp.float32)
    fwd_w1e_p = pad2(fwd_w1[:encoded_dim, :], enc_p, h2_p, bf16)   # host-side split
    fwd_w1a_p = pad2(fwd_w1[encoded_dim:, :], act_p, h2_p, bf16)
    fwd_b1_p = pad2(params["fwd_b1"], 1, h2_p, f32)
    fwd_w2_p = pad2(params["fwd_w2"], h2_p, out_p, bf16)
    fwd_b2_p = pad2(params["fwd_b2"], 1, out_p, f32)

    def batch_spec(cols):
        return pl.BlockSpec((tb, cols), lambda i: (i, 0))

    def resident_spec(shape):
        # Same block for every grid step -> weights stay VMEM-resident.
        return pl.BlockSpec(shape, lambda i: (0, 0))

    in_specs = [
        batch_spec(obs_p), batch_spec(act_p),
        resident_spec(enc_w1_p.shape), resident_spec(enc_b1_p.shape),
        resident_spec(enc_w2_p.shape), resident_spec(enc_b2_p.shape),
        resident_spec(fwd_w1e_p.shape), resident_spec(fwd_w1a_p.shape),
        resident_spec(fwd_b1_p.shape),
        resident_spec(fwd_w2_p.shape), resident_spec(fwd_b2_p.shape),
    ]
    out_spec = pl.BlockSpec((tb, out_p), lambda i: (i, 0))

    out_padded = pl.pallas_call(
        _forward_env_model_kernel,
        out_shape=jax.ShapeDtypeStruct((b_pad, out_p), jnp.float32),
        grid=grid,
        in_specs=in_specs,
        out_specs=out_spec,
        compiler_params=pltpu.CompilerParams(
            dimension_semantics=("parallel",),        # v7x: shard batch tiles across 2 TCs
            vmem_limit_bytes=32 * 1024 * 1024,        # well inside v7x's 64 MiB physical VMEM
        ),
    )(obs_v, act_v,
      enc_w1_p, enc_b1_p, enc_w2_p, enc_b2_p,
      fwd_w1e_p, fwd_w1a_p, fwd_b1_p, fwd_w2_p, fwd_b2_p)

    return out_padded[:batch, :encoded_dim]


def _init_linear(key, in_dim, out_dim):
    """Deterministic small-scale init. Weight stored as (in, out), bias as (1, out)."""
    kw, kb = jax.random.split(key)
    bound = 1.0 / jnp.sqrt(in_dim)
    w = jax.random.uniform(kw, (in_dim, out_dim), jnp.float32, -bound, bound)
    b = jax.random.uniform(kb, (1, out_dim), jnp.float32, -bound, bound)
    return w, b


def _reference(obs, action, params, encoded_dim):
    """Pure-JAX reference mirroring the PyTorch forward pass with the same bf16 operand
    casts / f32 accumulation as the kernel."""
    bf = jnp.bfloat16

    def dot(a, b):
        return jnp.dot(a.astype(bf), b.astype(bf), preferred_element_type=jnp.float32)

    h = jnp.maximum(dot(obs, params["enc_w1"]) + params["enc_b1"], 0.0)
    enc = dot(h, params["enc_w2"]) + params["enc_b2"]
    x = jnp.concatenate([enc, action], axis=1)          # torch.hstack on 2-D tensors
    g = jnp.maximum(dot(x, params["fwd_w1"]) + params["fwd_b1"], 0.0)
    return dot(g, params["fwd_w2"]) + params["fwd_b2"]


if __name__ == "__main__":
    # Small shapes consistent with the module's forward pass.
    batch = 8
    obs_dim = 16
    encoded_dim = 32
    action_dim = 8
    enc_hidden = 32     # encoder hidden_layer_sizes = [32]
    fwd_hidden = 32     # forward-model hidden_layer_sizes = [32]

    root = jax.random.PRNGKey(0)
    keys = jax.random.split(root, 6)

    obs = jax.random.normal(keys[0], (batch, obs_dim), jnp.float32)
    action = jax.random.normal(keys[1], (batch, action_dim), jnp.float32)

    enc_w1, enc_b1 = _init_linear(keys[2], obs_dim, enc_hidden)
    enc_w2, enc_b2 = _init_linear(keys[3], enc_hidden, encoded_dim)
    fwd_w1, fwd_b1 = _init_linear(keys[4], encoded_dim + action_dim, fwd_hidden)
    fwd_w2, fwd_b2 = _init_linear(keys[5], fwd_hidden, encoded_dim)

    params = dict(
        enc_w1=enc_w1, enc_b1=enc_b1, enc_w2=enc_w2, enc_b2=enc_b2,
        fwd_w1=fwd_w1, fwd_b1=fwd_b1, fwd_w2=fwd_w2, fwd_b2=fwd_b2,
    )

    out = forward_environment_model(obs, action, params, encoded_dim=encoded_dim)
    out = jax.block_until_ready(out)

    ref = _reference(obs, action, params, encoded_dim)
    assert out.shape == (batch, encoded_dim)
    assert bool(jnp.all(jnp.isfinite(out)))
    assert jnp.allclose(out, ref, atol=1e-2, rtol=1e-2)

    print("KERNEL_OK")
</pallas_src>

<mosaic_0001>
module attributes {stable_mosaic.version = 11 : i64} {
  func.func @_forward_env_model_kernel(%arg0: i32, %arg1: memref<8x128xbf16, #tpu.memory_space<vmem>>, %arg2: memref<8x128xbf16, #tpu.memory_space<vmem>>, %arg3: memref<128x128xbf16, #tpu.memory_space<vmem>>, %arg4: memref<1x128xf32, #tpu.memory_space<vmem>>, %arg5: memref<128x128xbf16, #tpu.memory_space<vmem>>, %arg6: memref<1x128xf32, #tpu.memory_space<vmem>>, %arg7: memref<128x128xbf16, #tpu.memory_space<vmem>>, %arg8: memref<128x128xbf16, #tpu.memory_space<vmem>>, %arg9: memref<1x128xf32, #tpu.memory_space<vmem>>, %arg10: memref<128x128xbf16, #tpu.memory_space<vmem>>, %arg11: memref<1x128xf32, #tpu.memory_space<vmem>>, %arg12: memref<8x128xf32, #tpu.memory_space<vmem>>) attributes {dimension_semantics = [#tpu.dimension_semantics<parallel>], iteration_bounds = array<i64: 1>, scalar_prefetch = 0 : i64, scratch_operands = 0 : i64, tpu.core_type = #tpu.core_type<tc>, window_params = [{transform_indices = @transform_0, window_bounds = array<i64: 8, 128>}, {transform_indices = @transform_1, window_bounds = array<i64: 8, 128>}, {pipeline_mode = #tpu.pipeline_mode<synchronous>, transform_indices = @transform_2, window_bounds = array<i64: 128, 128>}, {pipeline_mode = #tpu.pipeline_mode<synchronous>, transform_indices = @transform_3, window_bounds = array<i64: 1, 128>}, {pipeline_mode = #tpu.pipeline_mode<synchronous>, transform_indices = @transform_4, window_bounds = array<i64: 128, 128>}, {pipeline_mode = #tpu.pipeline_mode<synchronous>, transform_indices = @transform_5, window_bounds = array<i64: 1, 128>}, {pipeline_mode = #tpu.pipeline_mode<synchronous>, transform_indices = @transform_6, window_bounds = array<i64: 128, 128>}, {pipeline_mode = #tpu.pipeline_mode<synchronous>, transform_indices = @transform_7, window_bounds = array<i64: 128, 128>}, {pipeline_mode = #tpu.pipeline_mode<synchronous>, transform_indices = @transform_8, window_bounds = array<i64: 1, 128>}, {pipeline_mode = #tpu.pipeline_mode<synchronous>, transform_indices = @transform_9, window_bounds = array<i64: 128, 128>}, {pipeline_mode = #tpu.pipeline_mode<synchronous>, transform_indices = @transform_10, window_bounds = array<i64: 1, 128>}, {transform_indices = @transform_11, window_bounds = array<i64: 8, 128>}]} {
    %c0 = arith.constant 0 : index
    %c0_0 = arith.constant 0 : index
    %0 = vector.load %arg1[%c0, %c0_0] : memref<8x128xbf16, #tpu.memory_space<vmem>>, vector<8x128xbf16>
    %c0_1 = arith.constant 0 : index
    %c0_2 = arith.constant 0 : index
    %1 = vector.load %arg2[%c0_1, %c0_2] : memref<8x128xbf16, #tpu.memory_space<vmem>>, vector<8x128xbf16>
    %c0_3 = arith.constant 0 : index
    %c0_4 = arith.constant 0 : index
    %2 = vector.load %arg3[%c0_3, %c0_4] : memref<128x128xbf16, #tpu.memory_space<vmem>>, vector<128x128xbf16>
    %cst = arith.constant dense<0.000000e+00> : vector<8x128xf32>
    %3 = tpu.matmul %0, %2, %cst {dimension_numbers = #tpu.dot_dimension_numbers<[1], [0], [0], [1], [0, 0, 1, 1], [], []>} : vector<8x128xbf16>, vector<128x128xbf16>, vector<8x128xf32> -> vector<8x128xf32>
    %c0_5 = arith.constant 0 : index
    %c0_6 = arith.constant 0 : index
    %4 = vector.load %arg4[%c0_5, %c0_6] : memref<1x128xf32, #tpu.memory_space<vmem>>, vector<1x128xf32>
    %5 = vector.broadcast %4 : vector<1x128xf32> to vector<8x128xf32>
    %6 = arith.addf %3, %5 : vector<8x128xf32>
    %cst_7 = arith.constant 0.000000e+00 : f32
    %7 = vector.broadcast %cst_7 : f32 to vector<8x128xf32>
    %8 = arith.maximumf %6, %7 : vector<8x128xf32>
    %9 = arith.truncf %8 : vector<8x128xf32> to vector<8x128xbf16>
    %c0_8 = arith.constant 0 : index
    %c0_9 = arith.constant 0 : index
    %10 = vector.load %arg5[%c0_8, %c0_9] : memref<128x128xbf16, #tpu.memory_space<vmem>>, vector<128x128xbf16>
    %cst_10 = arith.constant dense<0.000000e+00> : vector<8x128xf32>
    %11 = tpu.matmul %9, %10, %cst_10 {dimension_numbers = #tpu.dot_dimension_numbers<[1], [0], [0], [1], [0, 0, 1, 1], [], []>} : vector<8x128xbf16>, vector<128x128xbf16>, vector<8x128xf32> -> vector<8x128xf32>
    %c0_11 = arith.constant 0 : index
    %c0_12 = arith.constant 0 : index
    %12 = vector.load %arg6[%c0_11, %c0_12] : memref<1x128xf32, #tpu.memory_space<vmem>>, vector<1x128xf32>
    %13 = vector.broadcast %12 : vector<1x128xf32> to vector<8x128xf32>
    %14 = arith.addf %11, %13 : vector<8x128xf32>
    %15 = arith.truncf %14 : vector<8x128xf32> to vector<8x128xbf16>
    %c0_13 = arith.constant 0 : index
    %c0_14 = arith.constant 0 : index
    %16 = vector.load %arg7[%c0_13, %c0_14] : memref<128x128xbf16, #tpu.memory_space<vmem>>, vector<128x128xbf16>
    %cst_15 = arith.constant dense<0.000000e+00> : vector<8x128xf32>
    %17 = tpu.matmul %15, %16, %cst_15 {dimension_numbers = #tpu.dot_dimension_numbers<[1], [0], [0], [1], [0, 0, 1, 1], [], []>} : vector<8x128xbf16>, vector<128x128xbf16>, vector<8x128xf32> -> vector<8x128xf32>
    %c0_16 = arith.constant 0 : index
    %c0_17 = arith.constant 0 : index
    %18 = vector.load %arg8[%c0_16, %c0_17] : memref<128x128xbf16, #tpu.memory_space<vmem>>, vector<128x128xbf16>
    %cst_18 = arith.constant dense<0.000000e+00> : vector<8x128xf32>
    %19 = tpu.matmul %1, %18, %cst_18 {dimension_numbers = #tpu.dot_dimension_numbers<[1], [0], [0], [1], [0, 0, 1, 1], [], []>} : vector<8x128xbf16>, vector<128x128xbf16>, vector<8x128xf32> -> vector<8x128xf32>
    %20 = arith.addf %17, %19 : vector<8x128xf32>
    %c0_19 = arith.constant 0 : index
    %c0_20 = arith.constant 0 : index
    %21 = vector.load %arg9[%c0_19, %c0_20] : memref<1x128xf32, #tpu.memory_space<vmem>>, vector<1x128xf32>
    %22 = vector.broadcast %21 : vector<1x128xf32> to vector<8x128xf32>
    %23 = arith.addf %20, %22 : vector<8x128xf32>
    %cst_21 = arith.constant 0.000000e+00 : f32
    %24 = vector.broadcast %cst_21 : f32 to vector<8x128xf32>
    %25 = arith.maximumf %23, %24 : vector<8x128xf32>
    %26 = arith.truncf %25 : vector<8x128xf32> to vector<8x128xbf16>
    %c0_22 = arith.constant 0 : index
    %c0_23 = arith.constant 0 : index
    %27 = vector.load %arg10[%c0_22, %c0_23] : memref<128x128xbf16, #tpu.memory_space<vmem>>, vector<128x128xbf16>
    %cst_24 = arith.constant dense<0.000000e+00> : vector<8x128xf32>
    %28 = tpu.matmul %26, %27, %cst_24 {dimension_numbers = #tpu.dot_dimension_numbers<[1], [0], [0], [1], [0, 0, 1, 1], [], []>} : vector<8x128xbf16>, vector<128x128xbf16>, vector<8x128xf32> -> vector<8x128xf32>
    %c0_25 = arith.constant 0 : index
    %c0_26 = arith.constant 0 : index
    %29 = vector.load %arg11[%c0_25, %c0_26] : memref<1x128xf32, #tpu.memory_space<vmem>>, vector<1x128xf32>
    %30 = vector.broadcast %29 : vector<1x128xf32> to vector<8x128xf32>
    %31 = arith.addf %28, %30 : vector<8x128xf32>
    %c0_27 = arith.constant 0 : index
    %c0_28 = arith.constant 0 : index
    %32 = vector.load %arg12[%c0_27, %c0_28] : memref<8x128xf32, #tpu.memory_space<vmem>>, vector<8x128xf32>
    tpu.vector_store %arg12[%c0_27, %c0_28], %31 {strides = array<i32>} : memref<8x128xf32, #tpu.memory_space<vmem>>, vector<8x128xf32>,
    return
  }
  func.func @transform_0(%arg0: i32) -> (i32, i32) {
    %c0_i32 = arith.constant 0 : i32
    %c0_i32_0 = arith.constant 0 : i32
    return %arg0, %c0_i32 : i32, i32
  }
  func.func @transform_1(%arg0: i32) -> (i32, i32) {
    %c0_i32 = arith.constant 0 : i32
    %c0_i32_0 = arith.constant 0 : i32
    return %arg0, %c0_i32 : i32, i32
  }
  func.func @transform_2(%arg0: i32) -> (i32, i32) {
    %c0_i32 = arith.constant 0 : i32
    %c0_i32_0 = arith.constant 0 : i32
    %c0_i32_1 = arith.constant 0 : i32
    return %c0_i32, %c0_i32_0 : i32, i32
  }
  func.func @transform_3(%arg0: i32) -> (i32, i32) {
    %c0_i32 = arith.constant 0 : i32
    %c0_i32_0 = arith.constant 0 : i32
    %c0_i32_1 = arith.constant 0 : i32
    return %c0_i32, %c0_i32_0 : i32, i32
  }
  func.func @transform_4(%arg0: i32) -> (i32, i32) {
    %c0_i32 = arith.constant 0 : i32
    %c0_i32_0 = arith.constant 0 : i32
    %c0_i32_1 = arith.constant 0 : i32
    return %c0_i32, %c0_i32_0 : i32, i32
  }
  func.func @transform_5(%arg0: i32) -> (i32, i32) {
    %c0_i32 = arith.constant 0 : i32
    %c0_i32_0 = arith.constant 0 : i32
    %c0_i32_1 = arith.constant 0 : i32
    return %c0_i32, %c0_i32_0 : i32, i32
  }
  func.func @transform_6(%arg0: i32) -> (i32, i32) {
    %c0_i32 = arith.constant 0 : i32
    %c0_i32_0 = arith.constant 0 : i32
    %c0_i32_1 = arith.constant 0 : i32
    return %c0_i32, %c0_i32_0 : i32, i32
  }
  func.func @transform_7(%arg0: i32) -> (i32, i32) {
    %c0_i32 = arith.constant 0 : i32
    %c0_i32_0 = arith.constant 0 : i32
    %c0_i32_1 = arith.constant 0 : i32
    return %c0_i32, %c0_i32_0 : i32, i32
  }
  func.func @transform_8(%arg0: i32) -> (i32, i32) {
    %c0_i32 = arith.constant 0 : i32
    %c0_i32_0 = arith.constant 0 : i32
    %c0_i32_1 = arith.constant 0 : i32
    return %c0_i32, %c0_i32_0 : i32, i32
  }
  func.func @transform_9(%arg0: i32) -> (i32, i32) {
    %c0_i32 = arith.constant 0 : i32
    %c0_i32_0 = arith.constant 0 : i32
    %c0_i32_1 = arith.constant 0 : i32
    return %c0_i32, %c0_i32_0 : i32, i32
  }
  func.func @transform_10(%arg0: i32) -> (i32, i32) {
    %c0_i32 = arith.constant 0 : i32
    %c0_i32_0 = arith.constant 0 : i32
    %c0_i32_1 = arith.constant 0 : i32
    return %c0_i32, %c0_i32_0 : i32, i32
  }
  func.func @transform_11(%arg0: i32) -> (i32, i32) {
    %c0_i32 = arith.constant 0 : i32
    %c0_i32_0 = arith.constant 0 : i32
    return %arg0, %c0_i32 : i32, i32
  }
}

</mosaic_0001>

<llo_original>
// kernel: tpu_custom_call.1
$region0: #{tpu_custom_call.1}
  #allocation0 [shape = 'u32[]', space=smem, size = 0x4, offset = 0x4, fixed_abs, tag = 'smem constant byte address 0x4 - core index']
  #allocation1 [shape = 'u32[144,128]{1,0:T(1,128)}', space=vmem, size = 0x12000, scoped, tag = 'internal scratch']
  %s0 = inlined_call_operand.hbm [shape: bf16[8,128], index: 0, kind: input, shape index: {}]
  %s1 = inlined_call_operand.hbm [shape: bf16[8,128], index: 1, kind: input, shape index: {}]
  %s2 = inlined_call_operand.hbm [shape: bf16[128,128], index: 2, kind: input, shape index: {}]
  %s3 = inlined_call_operand.vmem [shape: f32[1,128], index: 3, kind: input, shape index: {}]
  %s4 = inlined_call_operand.hbm [shape: bf16[128,128], index: 4, kind: input, shape index: {}]
  %s5 = inlined_call_operand.vmem [shape: f32[1,128], index: 5, kind: input, shape index: {}]
  %s6 = inlined_call_operand.hbm [shape: bf16[128,128], index: 6, kind: input, shape index: {}]
  %s7 = inlined_call_operand.hbm [shape: bf16[128,128], index: 7, kind: input, shape index: {}]
  %s8 = inlined_call_operand.vmem [shape: f32[1,128], index: 8, kind: input, shape index: {}]
  %s9 = inlined_call_operand.hbm [shape: bf16[128,128], index: 9, kind: input, shape index: {}]
  %s10 = inlined_call_operand.vmem [shape: f32[1,128], index: 10, kind: input, shape index: {}]
  %s11 = inlined_call_operand.hbm [shape: f32[8,128], index: 11, kind: output, shape index: {}]
  %s12 = sld [smem:[#allocation0]]
  $region82: #{tpu_custom_call.1} parent=0
    _
  %s14 = ssub.s32 1, %s12
  %s15 = scalar_select 0, %s14, %s12
  $region1: #{tpu_custom_call.1} parent=0
    #allocation2 [shape = 'u8[2048]{0}', space=vmem, size = 0x800, scoped, tag = 'input window, operand 0, single buffered']
    #allocation3 [shape = 's32[1]{0}', space=sflag, size = 0x4, scoped, tag = 'scoped memory for tpu_custom_call.1']
    #allocation4 [shape = 's32[1]{0}', space=sflag, size = 0x4, scoped, tag = 'scoped memory for tpu_custom_call.1']
    #allocation5 [shape = 'u8[2048]{0}', space=vmem, size = 0x800, scoped, tag = 'input window, operand 1, single buffered']
    #allocation6 [shape = 's32[1]{0}', space=sflag, size = 0x4, scoped, tag = 'scoped memory for tpu_custom_call.1']
    #allocation7 [shape = 'u8[32768]{0}', space=vmem, size = 0x8000, scoped, tag = 'input window, operand 2, single buffered']
    #allocation8 [shape = 'u8[32768]{0}', space=vmem, size = 0x8000, scoped, tag = 'input window, operand 4, single buffered']
    #allocation9 [shape = 's32[1]{0}', space=sflag, size = 0x4, scoped, tag = 'scoped memory for tpu_custom_call.1']
    #allocation10 [shape = 'u8[32768]{0}', space=vmem, size = 0x8000, scoped, tag = 'input window, operand 6, single buffered']
    #allocation11 [shape = 'u8[32768]{0}', space=vmem, size = 0x8000, scoped, tag = 'input window, operand 7, single buffered']
    #allocation12 [shape = 's32[1]{0}', space=sflag, size = 0x4, scoped, tag = 'scoped memory for tpu_custom_call.1']
    #allocation13 [shape = 'u8[32768]{0}', space=vmem, size = 0x8000, scoped, tag = 'input window, operand 9, single buffered']
    #allocation14 [shape = 'u8[4096]{0}', space=vmem, size = 0x1000, scoped, tag = 'output window, operand 0, single buffered']
    %16 = vsyncpa [#allocation3], 0
    %17 = vsyncpa [#allocation6], 0
    %18 = vsyncpa [#allocation9], 0
    %19 = vsyncpa [#allocation12], 0
    %20 = vsyncpa [#allocation4], 0
    // Predicated region
    $region2: #{tpu_custom_call.1} parent=1 // pred_check
      _
    $region3: #{tpu_custom_call.1} parent=1 // pred_check_branch
      %22 = sbr.rel (0) target = $region5
    $region4: #{tpu_custom_call.1} parent=1 // pred_region
      %s24 = ssub.s32 64, 64
      %25 = vsyncadd [#allocation3], %s24
      %s27 = sshll.u32 [#allocation2], 4
      %s28 = int_to_ptr.vmem [resolvable:$true] %s27
      %30 = dma.hbm_to_vmem [thread:$0]  %s0, 64, %s28, [#allocation3]
    $region5: #{tpu_custom_call.1} parent=1 // pred_fallthru
      _
    // Predicated region
    $region6: #{tpu_custom_call.1} parent=1 // pred_check
      _
    $region7: #{tpu_custom_call.1} parent=1 // pred_check_branch
      %32 = sbr.rel (0) target = $region9
    $region8: #{tpu_custom_call.1} parent=1 // pred_region
      %s34 = ssub.s32 64, 64
      %35 = vsyncadd [#allocation6], %s34
      %s37 = sshll.u32 [#allocation5], 4
      %s38 = int_to_ptr.vmem [resolvable:$true] %s37
      %40 = dma.hbm_to_vmem [thread:$0]  %s1, 64, %s38, [#allocation6]
    $region9: #{tpu_custom_call.1} parent=1 // pred_fallthru
      _
    // Predicated region
    $region10: #{tpu_custom_call.1} parent=1 // pred_check
      _
    $region11: #{tpu_custom_call.1} parent=1 // pred_check_branch
      %42 = sbr.rel (0) target = $region13
    $region12: #{tpu_custom_call.1} parent=1 // pred_region
      %s44 = ssub.s32 1024, 1024
      %45 = vsyncadd [#allocation6], %s44
      %s46 = sshll.u32 [#allocation7], 4
      %s47 = int_to_ptr.vmem [resolvable:$true] %s46
      %52 = dma.hbm_to_vmem [thread:$0]  %s2, 1024, %s47, [#allocation6], 64, 64, 4
    $region13: #{tpu_custom_call.1} parent=1 // pred_fallthru
      _
    // Predicated region
    $region14: #{tpu_custom_call.1} parent=1 // pred_check
      _
    $region15: #{tpu_custom_call.1} parent=1 // pred_check_branch
      %54 = sbr.rel (0) target = $region17
    $region16: #{tpu_custom_call.1} parent=1 // pred_region
      _
    $region17: #{tpu_custom_call.1} parent=1 // pred_fallthru
      _
    // Predicated region
    $region18: #{tpu_custom_call.1} parent=1 // pred_check
      _
    $region19: #{tpu_custom_call.1} parent=1 // pred_check_branch
      %56 = sbr.rel (0) target = $region21
    $region20: #{tpu_custom_call.1} parent=1 // pred_region
      %s58 = ssub.s32 1024, 1024
      %59 = vsyncadd [#allocation9], %s58
      %s60 = sshll.u32 [#allocation8], 4
      %s61 = int_to_ptr.vmem [resolvable:$true] %s60
      %66 = dma.hbm_to_vmem [thread:$0]  %s4, 1024, %s61, [#allocation9], 64, 64, 4
    $region21: #{tpu_custom_call.1} parent=1 // pred_fallthru
      _
    // Predicated region
    $region22: #{tpu_custom_call.1} parent=1 // pred_check
      _
    $region23: #{tpu_custom_call.1} parent=1 // pred_check_branch
      %68 = sbr.rel (0) target = $region25
    $region24: #{tpu_custom_call.1} parent=1 // pred_region
      _
    $region25: #{tpu_custom_call.1} parent=1 // pred_fallthru
      _
    // Predicated region
    $region26: #{tpu_custom_call.1} parent=1 // pred_check
      _
    $region27: #{tpu_custom_call.1} parent=1 // pred_check_branch
      %70 = sbr.rel (0) target = $region29
    $region28: #{tpu_custom_call.1} parent=1 // pred_region
      %s72 = ssub.s32 1024, 1024
      %73 = vsyncadd [#allocation9], %s72
      %s74 = sshll.u32 [#allocation10], 4
      %s75 = int_to_ptr.vmem [resolvable:$true] %s74
      %80 = dma.hbm_to_vmem [thread:$0]  %s6, 1024, %s75, [#allocation9], 64, 64, 4
    $region29: #{tpu_custom_call.1} parent=1 // pred_fallthru
      _
    // Predicated region
    $region30: #{tpu_custom_call.1} parent=1 // pred_check
      _
    $region31: #{tpu_custom_call.1} parent=1 // pred_check_branch
      %82 = sbr.rel (0) target = $region33
    $region32: #{tpu_custom_call.1} parent=1 // pred_region
      %s84 = ssub.s32 1024, 1024
      %85 = vsyncadd [#allocation12], %s84
      %s86 = sshll.u32 [#allocation11], 4
      %s87 = int_to_ptr.vmem [resolvable:$true] %s86
      %92 = dma.hbm_to_vmem [thread:$0]  %s7, 1024, %s87, [#allocation12], 64, 64, 4
    $region33: #{tpu_custom_call.1} parent=1 // pred_fallthru
      _
    // Predicated region
    $region34: #{tpu_custom_call.1} parent=1 // pred_check
      _
    $region35: #{tpu_custom_call.1} parent=1 // pred_check_branch
      %94 = sbr.rel (0) target = $region37
    $region36: #{tpu_custom_call.1} parent=1 // pred_region
      _
    $region37: #{tpu_custom_call.1} parent=1 // pred_fallthru
      _
    // Predicated region
    $region38: #{tpu_custom_call.1} parent=1 // pred_check
      _
    $region39: #{tpu_custom_call.1} parent=1 // pred_check_branch
      %96 = sbr.rel (0) target = $region41
    $region40: #{tpu_custom_call.1} parent=1 // pred_region
      %s98 = ssub.s32 1024, 1024
      %99 = vsyncadd [#allocation12], %s98
      %s100 = sshll.u32 [#allocation13], 4
      %s101 = int_to_ptr.vmem [resolvable:$true] %s100
      %106 = dma.hbm_to_vmem [thread:$0]  %s9, 1024, %s101, [#allocation12], 64, 64, 4
    $region41: #{tpu_custom_call.1} parent=1 // pred_fallthru
      _
    // Predicated region
    $region42: #{tpu_custom_call.1} parent=1 // pred_check
      _
    $region43: #{tpu_custom_call.1} parent=1 // pred_check_branch
      %108 = sbr.rel (0) target = $region45
    $region44: #{tpu_custom_call.1} parent=1 // pred_region
      _
    $region45: #{tpu_custom_call.1} parent=1 // pred_fallthru
      _
    // Predicated region
    $region46: #{tpu_custom_call.1} parent=1 // pred_check
      _
    $region47: #{tpu_custom_call.1} parent=1 // pred_check_branch
      %110 = sbr.rel (0) target = $region49
    $region48: #{tpu_custom_call.1} parent=1 // pred_region
      %111 = dma.done [#allocation3], 64
    $region49: #{tpu_custom_call.1} parent=1 // pred_fallthru
      _
    // Predicated region
    $region50: #{tpu_custom_call.1} parent=1 // pred_check
      _
    $region51: #{tpu_custom_call.1} parent=1 // pred_check_branch
      %113 = sbr.rel (0) target = $region53
    $region52: #{tpu_custom_call.1} parent=1 // pred_region
      %114 = dma.done [#allocation6], 64
    $region53: #{tpu_custom_call.1} parent=1 // pred_fallthru
      _
    // Predicated region
    $region54: #{tpu_custom_call.1} parent=1 // pred_check
      _
    $region55: #{tpu_custom_call.1} parent=1 // pred_check_branch
      %116 = sbr.rel (0) target = $region57
    $region56: #{tpu_custom_call.1} parent=1 // pred_region
      %117 = dma.done [#allocation6], 1024
    $region57: #{tpu_custom_call.1} parent=1 // pred_fallthru
      _
    // Predicated region
    $region58: #{tpu_custom_call.1} parent=1 // pred_check
      _
    $region59: #{tpu_custom_call.1} parent=1 // pred_check_branch
      %119 = sbr.rel (0) target = $region61
    $region60: #{tpu_custom_call.1} parent=1 // pred_region
      %120 = dma.done [#allocation9], 1024
    $region61: #{tpu_custom_call.1} parent=1 // pred_fallthru
      _
    // Predicated region
    $region62: #{tpu_custom_call.1} parent=1 // pred_check
      _
    $region63: #{tpu_custom_call.1} parent=1 // pred_check_branch
      %122 = sbr.rel (0) target = $region65
    $region64: #{tpu_custom_call.1} parent=1 // pred_region
      %123 = dma.done [#allocation9], 1024
    $region65: #{tpu_custom_call.1} parent=1 // pred_fallthru
      _
    // Predicated region
    $region66: #{tpu_custom_call.1} parent=1 // pred_check
      _
    $region67: #{tpu_custom_call.1} parent=1 // pred_check_branch
      %125 = sbr.rel (0) target = $region69
    $region68: #{tpu_custom_call.1} parent=1 // pred_region
      %126 = dma.done [#allocation12], 1024
    $region69: #{tpu_custom_call.1} parent=1 // pred_fallthru
      _
    // Predicated region
    $region70: #{tpu_custom_call.1} parent=1 // pred_check
      _
    $region71: #{tpu_custom_call.1} parent=1 // pred_check_branch
      %128 = sbr.rel (0) target = $region73
    $region72: #{tpu_custom_call.1} parent=1 // pred_region
      %129 = dma.done [#allocation12], 1024
    $region73: #{tpu_custom_call.1} parent=1 // pred_fallthru
      _
    %v131 = vld [vmem:[#allocation2] sm:$0xf]
    %v132 = vld [vmem:[#allocation5] sm:$0xf]
    %v133 = vld [vmem:[#allocation7] sm:$0xf]
    %v134 = vld [vmem:[#allocation7 + $0x4] sm:$0xf]
    %v135 = vld [vmem:[#allocation7 + $0x8] sm:$0xf]
    %v136 = vld [vmem:[#allocation7 + $0xc] sm:$0xf]
    %v137 = vld [vmem:[#allocation7 + $0x10] sm:$0xf]
    %v138 = vld [vmem:[#allocation7 + $0x14] sm:$0xf]
    %v139 = vld [vmem:[#allocation7 + $0x18] sm:$0xf]
    %v140 = vld [vmem:[#allocation7 + $0x1c] sm:$0xf]
    %v141 = vld [vmem:[#allocation7 + $0x20] sm:$0xf]
    %v142 = vld [vmem:[#allocation7 + $0x24] sm:$0xf]
    %v143 = vld [vmem:[#allocation7 + $0x28] sm:$0xf]
    %v144 = vld [vmem:[#allocation7 + $0x2c] sm:$0xf]
    %v145 = vld [vmem:[#allocation7 + $0x30] sm:$0xf]
    %v146 = vld [vmem:[#allocation7 + $0x34] sm:$0xf]
    %v147 = vld [vmem:[#allocation7 + $0x38] sm:$0xf]
    %v148 = vld [vmem:[#allocation7 + $0x3c] sm:$0xf]
    %v149 = vld [vmem:[%s3] sm:$0x1]
    %v151 = vlaneseq
    %v152 = vshrl.u32 %v151, 7
    %v153 = vsub.s32 0, %v152
    %v154 = vrot.slane %v149, %v153
    %v172 = vunpack.c.l.b16 %v133
    %v173 = vunpack.c.l.b16 %v134
    %v174 = vunpack.c.l.b16 %v135
    %v175 = vunpack.c.l.b16 %v136
    %v176 = vunpack.c.l.b16 %v137
    %v177 = vunpack.c.l.b16 %v138
    %v178 = vunpack.c.l.b16 %v139
    %v179 = vunpack.c.l.b16 %v140
    %v180 = vunpack.c.l.b16 %v141
    %v181 = vunpack.c.l.b16 %v142
    %v182 = vunpack.c.l.b16 %v143
    %v183 = vunpack.c.l.b16 %v144
    %v184 = vunpack.c.l.b16 %v145
    %v185 = vunpack.c.l.b16 %v146
    %v186 = vunpack.c.l.b16 %v147
    %v187 = vunpack.c.l.b16 %v148
    %v188 = vpack.c.b16 %v173, %v172
    %v189 = vpack.c.b16 %v175, %v174
    %v190 = vpack.c.b16 %v177, %v176
    %v191 = vpack.c.b16 %v179, %v178
    %v192 = vpack.c.b16 %v181, %v180
    %v193 = vpack.c.b16 %v183, %v182
    %v194 = vpack.c.b16 %v185, %v184
    %v195 = vpack.c.b16 %v187, %v186
    %204 = vmatprep.subr.bf16.mxu0 0
    %205 = vmatpush1.bf16.msra.mxu0 %v188
    %206 = vmatprep.subr.bf16.mxu0 0
    %207 = vmatpush1.bf16.msra.mxu0 %v189
    %208 = vmatprep.subr.bf16.mxu0 0
    %209 = vmatpush1.bf16.msra.mxu0 %v190
    %210 = vmatprep.subr.bf16.mxu0 0
    %211 = vmatpush1.bf16.msra.mxu0 %v191
    %212 = vmatprep.subr.bf16.mxu0 0
    %213 = vmatpush1.bf16.msra.mxu0 %v192
    %214 = vmatprep.subr.bf16.mxu0 0
    %215 = vmatpush1.bf16.msra.mxu0 %v193
    %216 = vmatprep.subr.bf16.mxu0 0
    %217 = vmatpush1.bf16.msra.mxu0 %v194
    %218 = vmatprep.subr.bf16.mxu0 0
    %219 = vmatpush1.bf16.msra.mxu0 %v195
    %220 = vmatprep.subr.bf16.mxu0 0
    %221 = vmatpush1.bf16.msra.mxu0 0
    %222 = vmatprep.subr.bf16.mxu0 0
    %223 = vmatpush1.bf16.msra.mxu0 0
    %224 = vmatprep.subr.bf16.mxu0 0
    %225 = vmatpush1.bf16.msra.mxu0 0
    %226 = vmatprep.subr.bf16.mxu0 0
    %227 = vmatpush1.bf16.msra.mxu0 0
    %228 = vmatprep.subr.bf16.mxu0 0
    %229 = vmatpush1.bf16.msra.mxu0 0
    %230 = vmatprep.subr.bf16.mxu0 0
    %231 = vmatpush1.bf16.msra.mxu0 0
    %232 = vmatprep.subr.bf16.mxu0 0
    %233 = vmatpush1.bf16.msra.mxu0 0
    %234 = vmatprep.subr.bf16.mxu0 0
    %235 = vmatpush1.bf16.msra.mxu0 0
    %236 = vmatprep.mubr.bf16.mxu0 0
    %237 = vmatmul.mubr.bf16.gmra.mrb[0].mxu0 %v131
    %v238 = vpop.f32.mrb[0].mxu0
    %v239 = vadd.f32 %v154, %v238
    %v240 = vpop.f32.mrb[0].mxu0
    %v241 = vpop.f32.mrb[0].mxu0
    %v242 = vpop.f32.mrb[0].mxu0
    %243 = vdwg.mxu0
    %v244 = vmax.f32 %v239, 0.0
    %v245 = vpack.c.bf16 %v244, %v244
    %v246 = vld [vmem:[#allocation8] sm:$0xf]
    %v247 = vld [vmem:[#allocation8 + $0x4] sm:$0xf]
    %v248 = vld [vmem:[#allocation8 + $0x8] sm:$0xf]
    %v249 = vld [vmem:[#allocation8 + $0xc] sm:$0xf]
    %v250 = vld [vmem:[#allocation8 + $0x10] sm:$0xf]
    %v251 = vld [vmem:[#allocation8 + $0x14] sm:$0xf]
    %v252 = vld [vmem:[#allocation8 + $0x18] sm:$0xf]
    %v253 = vld [vmem:[#allocation8 + $0x1c] sm:$0xf]
    %v254 = vld [vmem:[#allocation8 + $0x20] sm:$0xf]
    %v255 = vld [vmem:[#allocation8 + $0x24] sm:$0xf]
    %v256 = vld [vmem:[#allocation8 + $0x28] sm:$0xf]
    %v257 = vld [vmem:[#allocation8 + $0x2c] sm:$0xf]
    %v258 = vld [vmem:[#allocation8 + $0x30] sm:$0xf]
    %v259 = vld [vmem:[#allocation8 + $0x34] sm:$0xf]
    %v260 = vld [vmem:[#allocation8 + $0x38] sm:$0xf]
    %v261 = vld [vmem:[#allocation8 + $0x3c] sm:$0xf]
    %v262 = vld [vmem:[%s5] sm:$0x1]
    %v264 = vlaneseq
    %v265 = vshrl.u32 %v264, 7
    %v266 = vsub.s32 0, %v265
    %v267 = vrot.slane %v262, %v266
    %v285 = vunpack.c.l.b16 %v246
    %v286 = vunpack.c.l.b16 %v247
    %v287 = vunpack.c.l.b16 %v248
    %v288 = vunpack.c.l.b16 %v249
    %v289 = vunpack.c.l.b16 %v250
    %v290 = vunpack.c.l.b16 %v251
    %v291 = vunpack.c.l.b16 %v252
    %v292 = vunpack.c.l.b16 %v253
    %v293 = vunpack.c.l.b16 %v254
    %v294 = vunpack.c.l.b16 %v255
    %v295 = vunpack.c.l.b16 %v256
    %v296 = vunpack.c.l.b16 %v257
    %v297 = vunpack.c.l.b16 %v258
    %v298 = vunpack.c.l.b16 %v259
    %v299 = vunpack.c.l.b16 %v260
    %v300 = vunpack.c.l.b16 %v261
    %v301 = vpack.c.b16 %v286, %v285
    %v302 = vpack.c.b16 %v288, %v287
    %v303 = vpack.c.b16 %v290, %v289
    %v304 = vpack.c.b16 %v292, %v291
    %v305 = vpack.c.b16 %v294, %v293
    %v306 = vpack.c.b16 %v296, %v295
    %v307 = vpack.c.b16 %v298, %v297
    %v308 = vpack.c.b16 %v300, %v299
    %317 = vmatprep.subr.bf16.mxu0 0
    %318 = vmatpush1.bf16.msra.mxu0 %v301
    %319 = vmatprep.subr.bf16.mxu0 0
    %320 = vmatpush1.bf16.msra.mxu0 %v302
    %321 = vmatprep.subr.bf16.mxu0 0
    %322 = vmatpush1.bf16.msra.mxu0 %v303
    %323 = vmatprep.subr.bf16.mxu0 0
    %324 = vmatpush1.bf16.msra.mxu0 %v304
    %325 = vmatprep.subr.bf16.mxu0 0
    %326 = vmatpush1.bf16.msra.mxu0 %v305
    %327 = vmatprep.subr.bf16.mxu0 0
    %328 = vmatpush1.bf16.msra.mxu0 %v306
    %329 = vmatprep.subr.bf16.mxu0 0
    %330 = vmatpush1.bf16.msra.mxu0 %v307
    %331 = vmatprep.subr.bf16.mxu0 0
    %332 = vmatpush1.bf16.msra.mxu0 %v308
    %333 = vmatprep.subr.bf16.mxu0 0
    %334 = vmatpush1.bf16.msra.mxu0 0
    %335 = vmatprep.subr.bf16.mxu0 0
    %336 = vmatpush1.bf16.msra.mxu0 0
    %337 = vmatprep.subr.bf16.mxu0 0
    %338 = vmatpush1.bf16.msra.mxu0 0
    %339 = vmatprep.subr.bf16.mxu0 0
    %340 = vmatpush1.bf16.msra.mxu0 0
    %341 = vmatprep.subr.bf16.mxu0 0
    %342 = vmatpush1.bf16.msra.mxu0 0
    %343 = vmatprep.subr.bf16.mxu0 0
    %344 = vmatpush1.bf16.msra.mxu0 0
    %345 = vmatprep.subr.bf16.mxu0 0
    %346 = vmatpush1.bf16.msra.mxu0 0
    %347 = vmatprep.subr.bf16.mxu0 0
    %348 = vmatpush1.bf16.msra.mxu0 0
    %349 = vmatprep.mubr.bf16.mxu0 0
    %350 = vmatmul.mubr.bf16.gmra.mrb[0].mxu0 %v245
    %v351 = vpop.f32.mrb[0].mxu0
    %v352 = vadd.f32 %v267, %v351
    %v353 = vpop.f32.mrb[0].mxu0
    %v354 = vpop.f32.mrb[0].mxu0
    %v355 = vpop.f32.mrb[0].mxu0
    %356 = vdwg.mxu0
    %v357 = vpack.c.bf16 %v352, %v352
    %v358 = vld [vmem:[#allocation10] sm:$0xf]
    %v359 = vld [vmem:[#allocation10 + $0x4] sm:$0xf]
    %v360 = vld [vmem:[#allocation10 + $0x8] sm:$0xf]
    %v361 = vld [vmem:[#allocation10 + $0xc] sm:$0xf]
    %v362 = vld [vmem:[#allocation10 + $0x10] sm:$0xf]
    %v363 = vld [vmem:[#allocation10 + $0x14] sm:$0xf]
    %v364 = vld [vmem:[#allocation10 + $0x18] sm:$0xf]
    %v365 = vld [vmem:[#allocation10 + $0x1c] sm:$0xf]
    %v366 = vld [vmem:[#allocation10 + $0x20] sm:$0xf]
    %v367 = vld [vmem:[#allocation10 + $0x24] sm:$0xf]
    %v368 = vld [vmem:[#allocation10 + $0x28] sm:$0xf]
    %v369 = vld [vmem:[#allocation10 + $0x2c] sm:$0xf]
    %v370 = vld [vmem:[#allocation10 + $0x30] sm:$0xf]
    %v371 = vld [vmem:[#allocation10 + $0x34] sm:$0xf]
    %v372 = vld [vmem:[#allocation10 + $0x38] sm:$0xf]
    %v373 = vld [vmem:[#allocation10 + $0x3c] sm:$0xf]
    %v374 = vld [vmem:[#allocation11] sm:$0xf]
    %v375 = vld [vmem:[#allocation11 + $0x4] sm:$0xf]
    %v376 = vld [vmem:[#allocation11 + $0x8] sm:$0xf]
    %v377 = vld [vmem:[#allocation11 + $0xc] sm:$0xf]
    %v378 = vld [vmem:[#allocation11 + $0x10] sm:$0xf]
    %v379 = vld [vmem:[#allocation11 + $0x14] sm:$0xf]
    %v380 = vld [vmem:[#allocation11 + $0x18] sm:$0xf]
    %v381 = vld [vmem:[#allocation11 + $0x1c] sm:$0xf]
    %v382 = vld [vmem:[#allocation11 + $0x20] sm:$0xf]
    %v383 = vld [vmem:[#allocation11 + $0x24] sm:$0xf]
    %v384 = vld [vmem:[#allocation11 + $0x28] sm:$0xf]
    %v385 = vld [vmem:[#allocation11 + $0x2c] sm:$0xf]
    %v386 = vld [vmem:[#allocation11 + $0x30] sm:$0xf]
    %v387 = vld [vmem:[#allocation11 + $0x34] sm:$0xf]
    %v388 = vld [vmem:[#allocation11 + $0x38] sm:$0xf]
    %v389 = vld [vmem:[#allocation11 + $0x3c] sm:$0xf]
    %v406 = vunpack.c.l.b16 %v374
    %v407 = vunpack.c.l.b16 %v375
    %v408 = vunpack.c.l.b16 %v376
    %v409 = vunpack.c.l.b16 %v377
    %v410 = vunpack.c.l.b16 %v378
    %v411 = vunpack.c.l.b16 %v379
    %v412 = vunpack.c.l.b16 %v380
    %v413 = vunpack.c.l.b16 %v381
    %v414 = vunpack.c.l.b16 %v382
    %v415 = vunpack.c.l.b16 %v383
    %v416 = vunpack.c.l.b16 %v384
    %v417 = vunpack.c.l.b16 %v385
    %v418 = vunpack.c.l.b16 %v386
    %v419 = vunpack.c.l.b16 %v387
    %v420 = vunpack.c.l.b16 %v388
    %v421 = vunpack.c.l.b16 %v389
    %v422 = vpack.c.b16 %v407, %v406
    %v423 = vpack.c.b16 %v409, %v408
    %v424 = vpack.c.b16 %v411, %v410
    %v425 = vpack.c.b16 %v413, %v412
    %v426 = vpack.c.b16 %v415, %v414
    %v427 = vpack.c.b16 %v417, %v416
    %v428 = vpack.c.b16 %v419, %v418
    %v429 = vpack.c.b16 %v421, %v420
    %438 = vmatprep.subr.bf16.mxu0 0
    %439 = vmatpush1.bf16.msra.mxu0 %v422
    %440 = vmatprep.subr.bf16.mxu0 0
    %441 = vmatpush1.bf16.msra.mxu0 %v423
    %442 = vmatprep.subr.bf16.mxu0 0
    %443 = vmatpush1.bf16.msra.mxu0 %v424
    %444 = vmatprep.subr.bf16.mxu0 0
    %445 = vmatpush1.bf16.msra.mxu0 %v425
    %446 = vmatprep.subr.bf16.mxu0 0
    %447 = vmatpush1.bf16.msra.mxu0 %v426
    %448 = vmatprep.subr.bf16.mxu0 0
    %449 = vmatpush1.bf16.msra.mxu0 %v427
    %450 = vmatprep.subr.bf16.mxu0 0
    %451 = vmatpush1.bf16.msra.mxu0 %v428
    %452 = vmatprep.subr.bf16.mxu0 0
    %453 = vmatpush1.bf16.msra.mxu0 %v429
    %454 = vmatprep.subr.bf16.mxu0 0
    %455 = vmatpush1.bf16.msra.mxu0 0
    %456 = vmatprep.subr.bf16.mxu0 0
    %457 = vmatpush1.bf16.msra.mxu0 0
    %458 = vmatprep.subr.bf16.mxu0 0
    %459 = vmatpush1.bf16.msra.mxu0 0
    %460 = vmatprep.subr.bf16.mxu0 0
    %461 = vmatpush1.bf16.msra.mxu0 0
    %462 = vmatprep.subr.bf16.mxu0 0
    %463 = vmatpush1.bf16.msra.mxu0 0
    %464 = vmatprep.subr.bf16.mxu0 0
    %465 = vmatpush1.bf16.msra.mxu0 0
    %466 = vmatprep.subr.bf16.mxu0 0
    %467 = vmatpush1.bf16.msra.mxu0 0
    %468 = vmatprep.subr.bf16.mxu0 0
    %469 = vmatpush1.bf16.msra.mxu0 0
    %470 = vmatprep.mubr.bf16.mxu0 0
    %471 = vmatmul.mubr.bf16.gmra.mrb[0].mxu0 %v132
    %v472 = vpop.f32.mrb[0].mxu0
    %v473 = vadd.f32 0.0, %v472
    %v474 = vpop.f32.mrb[0].mxu0
    %v475 = vpop.f32.mrb[0].mxu0
    %v476 = vpop.f32.mrb[0].mxu0
    %477 = vdwg.mxu0
    %v494 = vunpack.c.l.b16 %v358
    %v495 = vunpack.c.l.b16 %v359
    %v496 = vunpack.c.l.b16 %v360
    %v497 = vunpack.c.l.b16 %v361
    %v498 = vunpack.c.l.b16 %v362
    %v499 = vunpack.c.l.b16 %v363
    %v500 = vunpack.c.l.b16 %v364
    %v501 = vunpack.c.l.b16 %v365
    %v502 = vunpack.c.l.b16 %v366
    %v503 = vunpack.c.l.b16 %v367
    %v504 = vunpack.c.l.b16 %v368
    %v505 = vunpack.c.l.b16 %v369
    %v506 = vunpack.c.l.b16 %v370
    %v507 = vunpack.c.l.b16 %v371
    %v508 = vunpack.c.l.b16 %v372
    %v509 = vunpack.c.l.b16 %v373
    %v510 = vpack.c.b16 %v495, %v494
    %v511 = vpack.c.b16 %v497, %v496
    %v512 = vpack.c.b16 %v499, %v498
    %v513 = vpack.c.b16 %v501, %v500
    %v514 = vpack.c.b16 %v503, %v502
    %v515 = vpack.c.b16 %v505, %v504
    %v516 = vpack.c.b16 %v507, %v506
    %v517 = vpack.c.b16 %v509, %v508
    %526 = vmatprep.subr.bf16.mxu0 0
    %527 = vmatpush1.bf16.msra.mxu0 %v510
    %528 = vmatprep.subr.bf16.mxu0 0
    %529 = vmatpush1.bf16.msra.mxu0 %v511
    %530 = vmatprep.subr.bf16.mxu0 0
    %531 = vmatpush1.bf16.msra.mxu0 %v512
    %532 = vmatprep.subr.bf16.mxu0 0
    %533 = vmatpush1.bf16.msra.mxu0 %v513
    %534 = vmatprep.subr.bf16.mxu0 0
    %535 = vmatpush1.bf16.msra.mxu0 %v514
    %536 = vmatprep.subr.bf16.mxu0 0
    %537 = vmatpush1.bf16.msra.mxu0 %v515
    %538 = vmatprep.subr.bf16.mxu0 0
    %539 = vmatpush1.bf16.msra.mxu0 %v516
    %540 = vmatprep.subr.bf16.mxu0 0
    %541 = vmatpush1.bf16.msra.mxu0 %v517
    %542 = vmatprep.subr.bf16.mxu0 0
    %543 = vmatpush1.bf16.msra.mxu0 0
    %544 = vmatprep.subr.bf16.mxu0 0
    %545 = vmatpush1.bf16.msra.mxu0 0
    %546 = vmatprep.subr.bf16.mxu0 0
    %547 = vmatpush1.bf16.msra.mxu0 0
    %548 = vmatprep.subr.bf16.mxu0 0
    %549 = vmatpush1.bf16.msra.mxu0 0
    %550 = vmatprep.subr.bf16.mxu0 0
    %551 = vmatpush1.bf16.msra.mxu0 0
    %552 = vmatprep.subr.bf16.mxu0 0
    %553 = vmatpush1.bf16.msra.mxu0 0
    %554 = vmatprep.subr.bf16.mxu0 0
    %555 = vmatpush1.bf16.msra.mxu0 0
    %556 = vmatprep.subr.bf16.mxu0 0
    %557 = vmatpush1.bf16.msra.mxu0 0
    %558 = vmatprep.mubr.bf16.mxu0 0
    %559 = vmatmul.mubr.bf16.gmra.mrb[0].mxu0 %v357
    %v560 = vpop.f32.mrb[0].mxu0
    %v561 = vadd.f32 %v473, %v560
    %v562 = vpop.f32.mrb[0].mxu0
    %v563 = vpop.f32.mrb[0].mxu0
    %v564 = vpop.f32.mrb[0].mxu0
    %565 = vdwg.mxu0
    %v566 = vld [vmem:[%s8] sm:$0x1]
    %v568 = vlaneseq
    %v569 = vshrl.u32 %v568, 7
    %v570 = vsub.s32 0, %v569
    %v571 = vrot.slane %v566, %v570
    %v573 = vadd.f32 %v561, %v571
    %v574 = vmax.f32 %v573, 0.0
    %v575 = vpack.c.bf16 %v574, %v574
    %v576 = vld [vmem:[#allocation13] sm:$0xf]
    %v577 = vld [vmem:[#allocation13 + $0x4] sm:$0xf]
    %v578 = vld [vmem:[#allocation13 + $0x8] sm:$0xf]
    %v579 = vld [vmem:[#allocation13 + $0xc] sm:$0xf]
    %v580 = vld [vmem:[#allocation13 + $0x10] sm:$0xf]
    %v581 = vld [vmem:[#allocation13 + $0x14] sm:$0xf]
    %v582 = vld [vmem:[#allocation13 + $0x18] sm:$0xf]
    %v583 = vld [vmem:[#allocation13 + $0x1c] sm:$0xf]
    %v584 = vld [vmem:[#allocation13 + $0x20] sm:$0xf]
    %v585 = vld [vmem:[#allocation13 + $0x24] sm:$0xf]
    %v586 = vld [vmem:[#allocation13 + $0x28] sm:$0xf]
    %v587 = vld [vmem:[#allocation13 + $0x2c] sm:$0xf]
    %v588 = vld [vmem:[#allocation13 + $0x30] sm:$0xf]
    %v589 = vld [vmem:[#allocation13 + $0x34] sm:$0xf]
    %v590 = vld [vmem:[#allocation13 + $0x38] sm:$0xf]
    %v591 = vld [vmem:[#allocation13 + $0x3c] sm:$0xf]
    %v592 = vld [vmem:[%s10] sm:$0x1]
    %v594 = vlaneseq
    %v595 = vshrl.u32 %v594, 7
    %v596 = vsub.s32 0, %v595
    %v597 = vrot.slane %v592, %v596
    %v615 = vunpack.c.l.b16 %v576
    %v616 = vunpack.c.l.b16 %v577
    %v617 = vunpack.c.l.b16 %v578
    %v618 = vunpack.c.l.b16 %v579
    %v619 = vunpack.c.l.b16 %v580
    %v620 = vunpack.c.l.b16 %v581
    %v621 = vunpack.c.l.b16 %v582
    %v622 = vunpack.c.l.b16 %v583
    %v623 = vunpack.c.l.b16 %v584
    %v624 = vunpack.c.l.b16 %v585
    %v625 = vunpack.c.l.b16 %v586
    %v626 = vunpack.c.l.b16 %v587
    %v627 = vunpack.c.l.b16 %v588
    %v628 = vunpack.c.l.b16 %v589
    %v629 = vunpack.c.l.b16 %v590
    %v630 = vunpack.c.l.b16 %v591
    %v631 = vpack.c.b16 %v616, %v615
    %v632 = vpack.c.b16 %v618, %v617
    %v633 = vpack.c.b16 %v620, %v619
    %v634 = vpack.c.b16 %v622, %v621
    %v635 = vpack.c.b16 %v624, %v623
    %v636 = vpack.c.b16 %v626, %v625
    %v637 = vpack.c.b16 %v628, %v627
    %v638 = vpack.c.b16 %v630, %v629
    %647 = vmatprep.subr.bf16.mxu0 0
    %648 = vmatpush1.bf16.msra.mxu0 %v631
    %649 = vmatprep.subr.bf16.mxu0 0
    %650 = vmatpush1.bf16.msra.mxu0 %v632
    %651 = vmatprep.subr.bf16.mxu0 0
    %652 = vmatpush1.bf16.msra.mxu0 %v633
    %653 = vmatprep.subr.bf16.mxu0 0
    %654 = vmatpush1.bf16.msra.mxu0 %v634
    %655 = vmatprep.subr.bf16.mxu0 0
    %656 = vmatpush1.bf16.msra.mxu0 %v635
    %657 = vmatprep.subr.bf16.mxu0 0
    %658 = vmatpush1.bf16.msra.mxu0 %v636
    %659 = vmatprep.subr.bf16.mxu0 0
    %660 = vmatpush1.bf16.msra.mxu0 %v637
    %661 = vmatprep.subr.bf16.mxu0 0
    %662 = vmatpush1.bf16.msra.mxu0 %v638
    %663 = vmatprep.subr.bf16.mxu0 0
    %664 = vmatpush1.bf16.msra.mxu0 0
    %665 = vmatprep.subr.bf16.mxu0 0
    %666 = vmatpush1.bf16.msra.mxu0 0
    %667 = vmatprep.subr.bf16.mxu0 0
    %668 = vmatpush1.bf16.msra.mxu0 0
    %669 = vmatprep.subr.bf16.mxu0 0
    %670 = vmatpush1.bf16.msra.mxu0 0
    %671 = vmatprep.subr.bf16.mxu0 0
    %672 = vmatpush1.bf16.msra.mxu0 0
    %673 = vmatprep.subr.bf16.mxu0 0
    %674 = vmatpush1.bf16.msra.mxu0 0
    %675 = vmatprep.subr.bf16.mxu0 0
    %676 = vmatpush1.bf16.msra.mxu0 0
    %677 = vmatprep.subr.bf16.mxu0 0
    %678 = vmatpush1.bf16.msra.mxu0 0
    %679 = vmatprep.mubr.bf16.mxu0 0
    %680 = vmatmul.mubr.bf16.gmra.mrb[0].mxu0 %v575
    %v681 = vpop.f32.mrb[0].mxu0
    %v682 = vadd.f32 %v597, %v681
    %v683 = vpop.f32.mrb[0].mxu0
    %v684 = vpop.f32.mrb[0].mxu0
    %v685 = vpop.f32.mrb[0].mxu0
    %686 = vdwg.mxu0
    %687 = vst [vmem:[#allocation14] sm:$0xff] %v682
    // Predicated region
    $region74: #{tpu_custom_call.1} parent=1 // pred_check
      _
    $region75: #{tpu_custom_call.1} parent=1 // pred_check_branch
      %689 = sbr.rel (0) target = $region77
    $region76: #{tpu_custom_call.1} parent=1 // pred_region
      %s691 = ssub.s32 128, 128
      %692 = vsyncadd [#allocation4], %s691
      %s694 = sshll.u32 [#allocation14], 4
      %s695 = int_to_ptr.vmem [resolvable:$true] %s694
      %697 = dma.vmem_to_hbm [thread:$0]  %s695, 128, %s11, [#allocation4]
    $region77: #{tpu_custom_call.1} parent=1 // pred_fallthru
      _
    // Predicated region
    $region78: #{tpu_custom_call.1} parent=1 // pred_check
      _
    $region79: #{tpu_custom_call.1} parent=1 // pred_check_branch
      %699 = sbr.rel (0) target = $region81
    $region80: #{tpu_custom_call.1} parent=1 // pred_region
      %700 = dma.done [#allocation4], 128
    $region81: #{tpu_custom_call.1} parent=1 // pred_fallthru
      _
    %701 = vsyncpa [#allocation3], 1
    %702 = vsyncpa [#allocation6], 1
    %703 = vsyncpa [#allocation9], 1
    %704 = vsyncpa [#allocation12], 1
    %705 = vsyncpa [#allocation4], 1

</llo_original>
